<compile_context>
chip_gen: v5e
topology: v5e:2x2
jax: 0.10.0
libtpu: 0.0.40
codegen_flags: <defaults>
</compile_context>

<pallas_src>
from typing import NamedTuple

import jax
import jax.numpy as jnp
from jax.experimental import pallas as pl
from jax.experimental.pallas import tpu as pltpu

NEG_SLOPE = 0.01  # PyTorch nn.LeakyReLU default


def _leaky_relu(x):
    return jnp.where(x > 0, x, NEG_SLOPE * x)


def _round_up(n, m):
    return ((n + m - 1) // m) * m


def _vmem_capacity_bytes():
    try:
        return int(pltpu.get_tpu_info().vmem_capacity_bytes)
    except Exception:
        return 64 << 20  # conservative fallback: v7x per-TensorCore VMEM


class GeneratorParams(NamedTuple):
    """Lane-dense (128-padded), MXU-dtype weights. Build once, reuse per call."""
    w1p: jax.Array   # (in_p,  hid_p)  mxu_dtype
    b1p: jax.Array   # (1,     hid_p)  f32
    w2p: jax.Array   # (hid_p, out_p)  mxu_dtype
    b2p: jax.Array   # (1,     out_p)  f32
    in_dim: int
    hidden_dim: int
    out_dim: int


def prepare_generator_params(w1, b1, w2, b2, *, mxu_dtype=jnp.bfloat16):
    """Pad to multiples of 128 on the lane dims and cast to the MXU dtype once.

    mxu_dtype: jnp.bfloat16 (default, all generations), jnp.float32 (exact),
    or jnp.float8_e4m3fn (v7x only; unscaled cast — accuracy trade-off).
    Zero padding keeps the real outputs numerically exact.
    """
    in_dim, hidden_dim = w1.shape
    hidden_dim_w, out_dim = w2.shape
    assert hidden_dim == hidden_dim_w
    in_p = _round_up(in_dim, 128)
    hid_p = _round_up(hidden_dim, 128)
    out_p = _round_up(out_dim, 128)

    w1p = jnp.zeros((in_p, hid_p), mxu_dtype).at[:in_dim, :hidden_dim].set(
        w1.astype(mxu_dtype))
    w2p = jnp.zeros((hid_p, out_p), mxu_dtype).at[:hidden_dim, :out_dim].set(
        w2.astype(mxu_dtype))
    b1p = jnp.zeros((1, hid_p), jnp.float32).at[:, :hidden_dim].set(
        jnp.asarray(b1, jnp.float32).reshape(1, -1))
    b2p = jnp.zeros((1, out_p), jnp.float32).at[:, :out_dim].set(
        jnp.asarray(b2, jnp.float32).reshape(1, -1))
    return GeneratorParams(w1p, b1p, w2p, b2p, in_dim, hidden_dim, out_dim)


def generator_kernel(x_ref, w1_ref, b1_ref, w2_ref, b2_ref, o_ref):
    # Linear 1 on the MXU with f32 accumulation; bias + LeakyReLU in f32 (VPU).
    h = jnp.dot(x_ref[...], w1_ref[...], preferred_element_type=jnp.float32)
    h = _leaky_relu(h + b1_ref[...])
    # Linear 2: feed the MXU in the weight dtype (bf16/fp8 fast path).
    y = jnp.dot(h.astype(w2_ref.dtype), w2_ref[...],
                preferred_element_type=jnp.float32)
    y = _leaky_relu(y + b2_ref[...])
    o_ref[...] = y.astype(o_ref.dtype)


def generator_forward(x, params: GeneratorParams, *, tile_b=None,
                      vmem_budget_bytes=None, force_pallas=False,
                      min_pallas_flops=8e6):
    """Fused Generator forward.  x: (B, in_dim)."""
    B, in_dim = x.shape
    assert in_dim == params.in_dim
    w1p, b1p, w2p, b2p = params.w1p, params.b1p, params.w2p, params.b2p
    in_p, hid_p = w1p.shape
    out_p = w2p.shape[1]
    hidden_dim, out_dim = params.hidden_dim, params.out_dim
    mxu_dtype = w1p.dtype
    mxu_bytes = jnp.dtype(mxu_dtype).itemsize
    out_dtype = x.dtype
    out_bytes = jnp.dtype(out_dtype).itemsize

    # --- small-problem bailout: let XLA fuse the two tiny dots ----------------
    if not force_pallas and 2 * B * (in_p * hid_p + hid_p * out_p) < min_pallas_flops:
        h = _leaky_relu(x.astype(jnp.float32)
                        @ w1p[:in_dim, :hidden_dim].astype(jnp.float32)
                        + b1p[:, :hidden_dim])
        y = _leaky_relu(h @ w2p[:hidden_dim, :out_dim].astype(jnp.float32)
                        + b2p[:, :out_dim])
        return y.astype(out_dtype)

    # --- per-generation VMEM policy -------------------------------------------
    vmem_cap = _vmem_capacity_bytes()
    vmem_upper = max(vmem_cap - (16 << 20), 32 << 20)  # leave headroom for Mosaic scratch
    if vmem_budget_bytes is None:
        vmem_budget_bytes = vmem_upper

    # --- batch tile selection --------------------------------------------------
    sub = max(8, 32 // mxu_bytes)        # packed-sublane granularity (f32:8, bf16:16, fp8:32)
    B_pad_sub = _round_up(B, sub)

    if tile_b is None:
        tile_b = 1024
    tile_b = min(tile_b, B_pad_sub)
    # Keep >= 2 grid steps when the batch allows it so the "parallel" batch axis
    # can shard across v7x's two TensorCores.
    if B_pad_sub >= 2 * sub:
        tile_b = min(tile_b, max(sub, (B_pad_sub // 2 // sub) * sub))
    tile_b = max(sub, (tile_b // sub) * sub)

    def vmem_est(tb):
        io = 2 * tb * (in_p * mxu_bytes + out_p * out_bytes)        # double-buffered x / out
        wts = (in_p * hid_p + hid_p * out_p) * mxu_bytes            # single-buffered weights
        wts += (hid_p + out_p) * 4                                  # f32 biases
        inter = tb * (hid_p + out_p) * 4 + tb * hid_p * mxu_bytes   # f32 h/y + cast temp
        return io + wts + inter

    while vmem_est(tile_b) > vmem_budget_bytes and tile_b > sub:
        tile_b = max(sub, (tile_b // 2 // sub) * sub)
    if tile_b >= 128:                    # clean MXU M passes (v5e 4x128 array)
        tile_b = (tile_b // 128) * 128

    B_pad = _round_up(B, tile_b)
    grid = (B_pad // tile_b,)

    # --- activation pad/cast only when needed ----------------------------------
    if B_pad == B and in_p == in_dim and x.dtype == mxu_dtype:
        xp = x
    else:
        xp = jnp.zeros((B_pad, in_p), mxu_dtype).at[:B, :in_dim].set(
            x.astype(mxu_dtype))

    flops = 2 * B_pad * (in_p * hid_p + hid_p * out_p)
    bytes_accessed = (xp.size * mxu_bytes + (w1p.size + w2p.size) * mxu_bytes
                      + (b1p.size + b2p.size) * 4 + B_pad * out_p * out_bytes)
    vmem_limit = int(min(max(2 * vmem_est(tile_b), 32 << 20), vmem_upper))

    def run(resident_kwargs):
        return pl.pallas_call(
            generator_kernel,
            out_shape=jax.ShapeDtypeStruct((B_pad, out_p), out_dtype),
            grid_spec=pltpu.PrefetchScalarGridSpec(
                num_scalar_prefetch=0,
                grid=grid,
                in_specs=[
                    pl.BlockSpec((tile_b, in_p), lambda i: (i, 0)),               # x tile
                    pl.BlockSpec((in_p, hid_p), lambda i: (0, 0), **resident_kwargs),  # W1
                    pl.BlockSpec((1, hid_p), lambda i: (0, 0), **resident_kwargs),     # b1
                    pl.BlockSpec((hid_p, out_p), lambda i: (0, 0), **resident_kwargs), # W2
                    pl.BlockSpec((1, out_p), lambda i: (0, 0), **resident_kwargs),     # b2
                ],
                out_specs=pl.BlockSpec((tile_b, out_p), lambda i: (i, 0)),
            ),
            compiler_params=pltpu.CompilerParams(
                dimension_semantics=("parallel",),   # megacore sharding on v7x
                vmem_limit_bytes=vmem_limit,
            ),
            cost_estimate=pl.CostEstimate(
                flops=flops, transcendentals=0, bytes_accessed=bytes_accessed),
        )(xp, w1p, b1p, w2p, b2p)

    try:
        # Resident weights/biases never change across the grid -> single buffer.
        out_pad = run(dict(pipeline_mode=pl.Buffered(1)))
    except Exception:
        # Defensive fallback if single-buffering is rejected by this jax build.
        out_pad = run({})

    if B_pad == B and out_p == out_dim:
        return out_pad
    return out_pad[:B, :out_dim]


def init_generator_params(key, in_dim, hidden_dim, out_dim, dtype=jnp.float32):
    """Mimics PyTorch nn.Linear default init U(-1/sqrt(fan_in), +1/sqrt(fan_in))."""
    k1, k2, k3, k4 = jax.random.split(key, 4)
    bound1 = 1.0 / jnp.sqrt(in_dim)
    bound2 = 1.0 / jnp.sqrt(hidden_dim)
    # weights stored pre-transposed: (fan_in, fan_out)
    w1 = jax.random.uniform(k1, (in_dim, hidden_dim), dtype, -bound1, bound1)
    b1 = jax.random.uniform(k2, (1, hidden_dim), dtype, -bound1, bound1)
    w2 = jax.random.uniform(k3, (hidden_dim, out_dim), dtype, -bound2, bound2)
    b2 = jax.random.uniform(k4, (1, out_dim), dtype, -bound2, bound2)
    return w1, b1, w2, b2


if __name__ == "__main__":
    in_dim, hidden_dim, out_dim = 32, 64, 32
    batch = 64

    key = jax.random.PRNGKey(0)
    kx, kp = jax.random.split(key)
    x = jax.random.normal(kx, (batch, in_dim), dtype=jnp.float32)
    w1, b1, w2, b2 = init_generator_params(kp, in_dim, hidden_dim, out_dim)

    # Pure-JAX reference.
    h_ref = _leaky_relu(x @ w1 + b1)
    y_ref = _leaky_relu(h_ref @ w2 + b2)

    # f32 MXU path (exactness check) — force the Pallas path at this toy size.
    params_f32 = prepare_generator_params(w1, b1, w2, b2, mxu_dtype=jnp.float32)
    out_f32 = jax.block_until_ready(
        generator_forward(x, params_f32, force_pallas=True))

    # bf16 MXU path — the production throughput path (f32 accumulation).
    params_bf16 = prepare_generator_params(w1, b1, w2, b2, mxu_dtype=jnp.bfloat16)
    out_bf16 = jax.block_until_ready(
        generator_forward(x, params_bf16, force_pallas=True))

    # Small-problem bailout path (plain XLA) — default behaviour at this size.
    out_xla = jax.block_until_ready(generator_forward(x, params_f32))

    assert out_f32.shape == (batch, out_dim)
    assert out_bf16.shape == (batch, out_dim)
    assert jnp.allclose(out_f32, y_ref, atol=1e-5, rtol=1e-5)
    assert jnp.allclose(out_bf16, y_ref, atol=1e-1, rtol=1e-1)
    assert jnp.allclose(out_xla, y_ref, atol=1e-5, rtol=1e-5)

    print("KERNEL_OK")
</pallas_src>

<mosaic_0001>
module attributes {stable_mosaic.version = 11 : i64} {
  func.func @generator_kernel(%arg0: i32, %arg1: memref<32x128xf32, #tpu.memory_space<vmem>>, %arg2: memref<128x128xf32, #tpu.memory_space<vmem>>, %arg3: memref<1x128xf32, #tpu.memory_space<vmem>>, %arg4: memref<128x128xf32, #tpu.memory_space<vmem>>, %arg5: memref<1x128xf32, #tpu.memory_space<vmem>>, %arg6: memref<32x128xf32, #tpu.memory_space<vmem>>) attributes {dimension_semantics = [#tpu.dimension_semantics<parallel>], iteration_bounds = array<i64: 2>, scalar_prefetch = 0 : i64, scratch_operands = 0 : i64, tpu.core_type = #tpu.core_type<tc>, window_params = [{transform_indices = @transform_0, window_bounds = array<i64: 32, 128>}, {pipeline_mode = #tpu.pipeline_mode<synchronous>, transform_indices = @transform_1, window_bounds = array<i64: 128, 128>}, {pipeline_mode = #tpu.pipeline_mode<synchronous>, transform_indices = @transform_2, window_bounds = array<i64: 1, 128>}, {pipeline_mode = #tpu.pipeline_mode<synchronous>, transform_indices = @transform_3, window_bounds = array<i64: 128, 128>}, {pipeline_mode = #tpu.pipeline_mode<synchronous>, transform_indices = @transform_4, window_bounds = array<i64: 1, 128>}, {transform_indices = @transform_5, window_bounds = array<i64: 32, 128>}]} {
    %c0 = arith.constant 0 : index
    %c0_0 = arith.constant 0 : index
    %0 = vector.load %arg1[%c0, %c0_0] : memref<32x128xf32, #tpu.memory_space<vmem>>, vector<32x128xf32>
    %c0_1 = arith.constant 0 : index
    %c0_2 = arith.constant 0 : index
    %1 = vector.load %arg2[%c0_1, %c0_2] : memref<128x128xf32, #tpu.memory_space<vmem>>, vector<128x128xf32>
    %cst = arith.constant dense<0.000000e+00> : vector<32x128xf32>
    %2 = tpu.matmul %0, %1, %cst {dimension_numbers = #tpu.dot_dimension_numbers<[1], [0], [0], [1], [0, 0, 1, 1], [], []>} : vector<32x128xf32>, vector<128x128xf32>, vector<32x128xf32> -> vector<32x128xf32>
    %c0_3 = arith.constant 0 : index
    %c0_4 = arith.constant 0 : index
    %3 = vector.load %arg3[%c0_3, %c0_4] : memref<1x128xf32, #tpu.memory_space<vmem>>, vector<1x128xf32>
    %4 = vector.broadcast %3 : vector<1x128xf32> to vector<32x128xf32>
    %5 = arith.addf %2, %4 : vector<32x128xf32>
    %cst_5 = arith.constant 0.000000e+00 : f32
    %6 = vector.broadcast %cst_5 : f32 to vector<32x128xf32>
    %7 = arith.cmpf ogt, %5, %6 : vector<32x128xf32>
    %cst_6 = arith.constant 0.00999999977 : f32
    %8 = vector.broadcast %cst_6 : f32 to vector<32x128xf32>
    %9 = arith.mulf %8, %5 : vector<32x128xf32>
    %10 = arith.select %7, %5, %9 : vector<32x128xi1>, vector<32x128xf32>
    %c0_7 = arith.constant 0 : index
    %c0_8 = arith.constant 0 : index
    %11 = vector.load %arg4[%c0_7, %c0_8] : memref<128x128xf32, #tpu.memory_space<vmem>>, vector<128x128xf32>
    %cst_9 = arith.constant dense<0.000000e+00> : vector<32x128xf32>
    %12 = tpu.matmul %10, %11, %cst_9 {dimension_numbers = #tpu.dot_dimension_numbers<[1], [0], [0], [1], [0, 0, 1, 1], [], []>} : vector<32x128xf32>, vector<128x128xf32>, vector<32x128xf32> -> vector<32x128xf32>
    %c0_10 = arith.constant 0 : index
    %c0_11 = arith.constant 0 : index
    %13 = vector.load %arg5[%c0_10, %c0_11] : memref<1x128xf32, #tpu.memory_space<vmem>>, vector<1x128xf32>
    %14 = vector.broadcast %13 : vector<1x128xf32> to vector<32x128xf32>
    %15 = arith.addf %12, %14 : vector<32x128xf32>
    %cst_12 = arith.constant 0.000000e+00 : f32
    %16 = vector.broadcast %cst_12 : f32 to vector<32x128xf32>
    %17 = arith.cmpf ogt, %15, %16 : vector<32x128xf32>
    %cst_13 = arith.constant 0.00999999977 : f32
    %18 = vector.broadcast %cst_13 : f32 to vector<32x128xf32>
    %19 = arith.mulf %18, %15 : vector<32x128xf32>
    %20 = arith.select %17, %15, %19 : vector<32x128xi1>, vector<32x128xf32>
    %c0_14 = arith.constant 0 : index
    %c0_15 = arith.constant 0 : index
    %21 = vector.load %arg6[%c0_14, %c0_15] : memref<32x128xf32, #tpu.memory_space<vmem>>, vector<32x128xf32>
    tpu.vector_store %arg6[%c0_14, %c0_15], %20 {strides = array<i32>} : memref<32x128xf32, #tpu.memory_space<vmem>>, vector<32x128xf32>,
    return
  }
  func.func @transform_0(%arg0: i32) -> (i32, i32) {
    %c0_i32 = arith.constant 0 : i32
    %c0_i32_0 = arith.constant 0 : i32
    return %arg0, %c0_i32 : i32, i32
  }
  func.func @transform_1(%arg0: i32) -> (i32, i32) {
    %c0_i32 = arith.constant 0 : i32
    %c0_i32_0 = arith.constant 0 : i32
    %c0_i32_1 = arith.constant 0 : i32
    return %c0_i32, %c0_i32_0 : i32, i32
  }
  func.func @transform_2(%arg0: i32) -> (i32, i32) {
    %c0_i32 = arith.constant 0 : i32
    %c0_i32_0 = arith.constant 0 : i32
    %c0_i32_1 = arith.constant 0 : i32
    return %c0_i32, %c0_i32_0 : i32, i32
  }
  func.func @transform_3(%arg0: i32) -> (i32, i32) {
    %c0_i32 = arith.constant 0 : i32
    %c0_i32_0 = arith.constant 0 : i32
    %c0_i32_1 = arith.constant 0 : i32
    return %c0_i32, %c0_i32_0 : i32, i32
  }
  func.func @transform_4(%arg0: i32) -> (i32, i32) {
    %c0_i32 = arith.constant 0 : i32
    %c0_i32_0 = arith.constant 0 : i32
    %c0_i32_1 = arith.constant 0 : i32
    return %c0_i32, %c0_i32_0 : i32, i32
  }
  func.func @transform_5(%arg0: i32) -> (i32, i32) {
    %c0_i32 = arith.constant 0 : i32
    %c0_i32_0 = arith.constant 0 : i32
    return %arg0, %c0_i32 : i32, i32
  }
}

module attributes {stable_mosaic.version = 11 : i64} {
  func.func @generator_kernel(%arg0: i32, %arg1: memref<32x128xf32, #tpu.memory_space<vmem>>, %arg2: memref<128x128xf32, #tpu.memory_space<vmem>>, %arg3: memref<1x128xf32, #tpu.memory_space<vmem>>, %arg4: memref<128x128xf32, #tpu.memory_space<vmem>>, %arg5: memref<1x128xf32, #tpu.memory_space<vmem>>, %arg6: memref<32x128xf32, #tpu.memory_space<vmem>>) attributes {dimension_semantics = [#tpu.dimension_semantics<parallel>], iteration_bounds = array<i64: 2>, scalar_prefetch = 0 : i64, scratch_operands = 0 : i64, tpu.core_type = #tpu.core_type<tc>, window_params = [{transform_indices = @transform_0, window_bounds = array<i64: 32, 128>}, {pipeline_mode = #tpu.pipeline_mode<synchronous>, transform_indices = @transform_1, window_bounds = array<i64: 128, 128>}, {pipeline_mode = #tpu.pipeline_mode<synchronous>, transform_indices = @transform_2, window_bounds = array<i64: 1, 128>}, {pipeline_mode = #tpu.pipeline_mode<synchronous>, transform_indices = @transform_3, window_bounds = array<i64: 128, 128>}, {pipeline_mode = #tpu.pipeline_mode<synchronous>, transform_indices = @transform_4, window_bounds = array<i64: 1, 128>}, {transform_indices = @transform_5, window_bounds = array<i64: 32, 128>}]} {
    %c0 = arith.constant 0 : index
    %c0_0 = arith.constant 0 : index
    %0 = vector.load %arg1[%c0, %c0_0] : memref<32x128xf32, #tpu.memory_space<vmem>>, vector<32x128xf32>
    %c0_1 = arith.constant 0 : index
    %c0_2 = arith.constant 0 : index
    %1 = vector.load %arg2[%c0_1, %c0_2] : memref<128x128xf32, #tpu.memory_space<vmem>>, vector<128x128xf32>
    %cst = arith.constant dense<0.000000e+00> : vector<32x128xf32>
    %2 = tpu.matmul %0, %1, %cst {dimension_numbers = #tpu.dot_dimension_numbers<[1], [0], [0], [1], [0, 0, 1, 1], [], []>} : vector<32x128xf32>, vector<128x128xf32>, vector<32x128xf32> -> vector<32x128xf32>
    %c0_3 = arith.constant 0 : index
    %c0_4 = arith.constant 0 : index
    %3 = vector.load %arg3[%c0_3, %c0_4] : memref<1x128xf32, #tpu.memory_space<vmem>>, vector<1x128xf32>
    %4 = vector.broadcast %3 : vector<1x128xf32> to vector<32x128xf32>
    %5 = arith.addf %2, %4 : vector<32x128xf32>
    %cst_5 = arith.constant 0.000000e+00 : f32
    %6 = vector.broadcast %cst_5 : f32 to vector<32x128xf32>
    %7 = arith.cmpf ogt, %5, %6 : vector<32x128xf32>
    %cst_6 = arith.constant 0.00999999977 : f32
    %8 = vector.broadcast %cst_6 : f32 to vector<32x128xf32>
    %9 = arith.mulf %8, %5 : vector<32x128xf32>
    %10 = arith.select %7, %5, %9 : vector<32x128xi1>, vector<32x128xf32>
    %c0_7 = arith.constant 0 : index
    %c0_8 = arith.constant 0 : index
    %11 = vector.load %arg4[%c0_7, %c0_8] : memref<128x128xf32, #tpu.memory_space<vmem>>, vector<128x128xf32>
    %cst_9 = arith.constant dense<0.000000e+00> : vector<32x128xf32>
    %12 = tpu.matmul %10, %11, %cst_9 {dimension_numbers = #tpu.dot_dimension_numbers<[1], [0], [0], [1], [0, 0, 1, 1], [], []>} : vector<32x128xf32>, vector<128x128xf32>, vector<32x128xf32> -> vector<32x128xf32>
    %c0_10 = arith.constant 0 : index
    %c0_11 = arith.constant 0 : index
    %13 = vector.load %arg5[%c0_10, %c0_11] : memref<1x128xf32, #tpu.memory_space<vmem>>, vector<1x128xf32>
    %14 = vector.broadcast %13 : vector<1x128xf32> to vector<32x128xf32>
    %15 = arith.addf %12, %14 : vector<32x128xf32>
    %cst_12 = arith.constant 0.000000e+00 : f32
    %16 = vector.broadcast %cst_12 : f32 to vector<32x128xf32>
    %17 = arith.cmpf ogt, %15, %16 : vector<32x128xf32>
    %cst_13 = arith.constant 0.00999999977 : f32
    %18 = vector.broadcast %cst_13 : f32 to vector<32x128xf32>
    %19 = arith.mulf %18, %15 : vector<32x128xf32>
    %20 = arith.select %17, %15, %19 : vector<32x128xi1>, vector<32x128xf32>
    %c0_14 = arith.constant 0 : index
    %c0_15 = arith.constant 0 : index
    %21 = vector.load %arg6[%c0_14, %c0_15] : memref<32x128xf32, #tpu.memory_space<vmem>>, vector<32x128xf32>
    tpu.vector_store %arg6[%c0_14, %c0_15], %20 {strides = array<i32>} : memref<32x128xf32, #tpu.memory_space<vmem>>, vector<32x128xf32>,
    return
  }
  func.func @transform_0(%arg0: i32) -> (i32, i32) {
    %c0_i32 = arith.constant 0 : i32
    %c0_i32_0 = arith.constant 0 : i32
    return %arg0, %c0_i32 : i32, i32
  }
  func.func @transform_1(%arg0: i32) -> (i32, i32) {
    %c0_i32 = arith.constant 0 : i32
    %c0_i32_0 = arith.constant 0 : i32
    %c0_i32_1 = arith.constant 0 : i32
    return %c0_i32, %c0_i32_0 : i32, i32
  }
  func.func @transform_2(%arg0: i32) -> (i32, i32) {
    %c0_i32 = arith.constant 0 : i32
    %c0_i32_0 = arith.constant 0 : i32
    %c0_i32_1 = arith.constant 0 : i32
    return %c0_i32, %c0_i32_0 : i32, i32
  }
  func.func @transform_3(%arg0: i32) -> (i32, i32) {
    %c0_i32 = arith.constant 0 : i32
    %c0_i32_0 = arith.constant 0 : i32
    %c0_i32_1 = arith.constant 0 : i32
    return %c0_i32, %c0_i32_0 : i32, i32
  }
  func.func @transform_4(%arg0: i32) -> (i32, i32) {
    %c0_i32 = arith.constant 0 : i32
    %c0_i32_0 = arith.constant 0 : i32
    %c0_i32_1 = arith.constant 0 : i32
    return %c0_i32, %c0_i32_0 : i32, i32
  }
  func.func @transform_5(%arg0: i32) -> (i32, i32) {
    %c0_i32 = arith.constant 0 : i32
    %c0_i32_0 = arith.constant 0 : i32
    return %arg0, %c0_i32 : i32, i32
  }
}

</mosaic_0001>

<llo_original>
// kernel: tpu_custom_call.1
$region0: #{tpu_custom_call.1}
  #allocation0 [shape = 'u32[]', space=smem, size = 0x4, offset = 0x4, fixed_abs, tag = 'smem constant byte address 0x4 - core index']
  #allocation1 [shape = 'u32[72,128]{1,0:T(1,128)}', space=vmem, size = 0x9000, scoped, tag = 'internal scratch']
  %s0 = inlined_call_operand.hbm [shape: f32[64,128], index: 0, kind: input, shape index: {}]
  %s1 = inlined_call_operand.hbm [shape: f32[128,128], index: 1, kind: input, shape index: {}]
  %s2 = inlined_call_operand.vmem [shape: f32[1,128], index: 2, kind: input, shape index: {}]
  %s3 = inlined_call_operand.hbm [shape: f32[128,128], index: 3, kind: input, shape index: {}]
  %s4 = inlined_call_operand.vmem [shape: f32[1,128], index: 4, kind: input, shape index: {}]
  %s5 = inlined_call_operand.hbm [shape: f32[64,128], index: 5, kind: output, shape index: {}]
  %s6 = sld [smem:[#allocation0]]
  $region65: #{tpu_custom_call.1} parent=0
    _
  %s8 = ssub.s32 1, %s6
  %s9 = scalar_select 0, %s8, %s6
  $region1: #{tpu_custom_call.1} parent=0
    #allocation2 [shape = 'u8[32768]{0}', space=vmem, size = 0x8000, scoped, tag = 'input window, operand 0']
    #allocation3 [shape = 's32[2]{0}', space=sflag, size = 0x8, scoped, tag = 'scoped memory for tpu_custom_call.1']
    #allocation4 [shape = 's32[2]{0}', space=sflag, size = 0x8, scoped, tag = 'scoped memory for tpu_custom_call.1']
    #allocation5 [shape = 'u8[65536]{0}', space=vmem, size = 0x10000, scoped, tag = 'input window, operand 1, single buffered']
    #allocation6 [shape = 's32[1]{0}', space=sflag, size = 0x4, scoped, tag = 'scoped memory for tpu_custom_call.1']
    #allocation7 [shape = 'u8[65536]{0}', space=vmem, size = 0x10000, scoped, tag = 'input window, operand 3, single buffered']
    #allocation8 [shape = 'u8[32768]{0}', space=vmem, size = 0x8000, scoped, tag = 'output window, operand 0']
    %10 = vsyncpa [#allocation3], 0
    %s11 = scalar_lea.sflag [#allocation3], 1
    %12 = vsyncpa %s11, 0
    %13 = vsyncpa [#allocation6], 0
    %14 = vsyncpa [#allocation4], 0
    %s15 = scalar_lea.sflag [#allocation4], 1
    %16 = vsyncpa %s15, 0
    loop: start=0, step=1, limit=4
    $region2: #{tpu_custom_call.1} parent=1 // loop_pre_header
      _
    $region3: #{tpu_custom_call.1} parent=1 // loop_header
      %s18 = sphi 0, %s22
      %p19 = scmp.ge.s32.totalorder %s18, 4
      %s28 = sphi 0, %s30
      %s31 = sphi 0, %s28
      %s32 = sphi 0, %s31
      %s48 = sphi 0, %s32
      %s52 = sphi 0, %s52
      %s54 = sphi 0, %s52
      %s55 = sphi 0, %s54
      %s69 = sphi 0, %s55
      %s73 = sphi 0, %s73
      %s75 = sphi 0, %s73
      %s76 = sphi 0, %s75
      %s90 = sphi 0, %s76
      %s94 = sphi 0, %s94
      %s96 = sphi 0, %s94
      %s97 = sphi 0, %s96
      %s111 = sphi 0, %s97
      %s115 = sphi 0, %s115
      %s117 = sphi 0, %s115
      %s118 = sphi 0, %s117
      %s132 = sphi 0, %s118
      %s138 = sphi 0, %s140
      %s141 = sphi 0, %s138
      %s142 = sphi 0, %s141
      %s158 = sphi 0, %s142
    $region4: #{tpu_custom_call.1} parent=1 // loop_header_branch
      %21 = sbr.rel (%p19) target = $region8
    $region5: #{tpu_custom_call.1} parent=1 // loop_body
      %s23 = ssub.s32 %s18, 1
      %s24 = ssub.s32 %s18, 2
      %s25 = sadd.s32 %s18, 1
      %s26 = ssub.s32 %s18, %s25
      %p27 = scmp.eq.s32.totalorder %s26, 0
      %s29 = sadd.s32 %s28, 1
      %s30 = scalar_select %p27, %s28, %s29
      %p33 = pneg %p27
      %p34 = scmp.eq.s32.totalorder %s18, 1
      %p35 = por %p33, %p34
      %p36 = scmp.ne.s32.totalorder %s28, %s31
      %p37 = scmp.eq.s32.totalorder %s18, 0
      %p38 = por %p36, %p37
      %p39 = scmp.ne.s32.totalorder %s28, %s31
      %p40 = scmp.eq.s32.totalorder %s23, 1
      %p41 = por %p39, %p40
      %p42 = scmp.ne.s32.totalorder %s31, %s32
      %p43 = scmp.eq.s32.totalorder %s23, 0
      %p44 = por %p42, %p43
      %p45 = scmp.ne.s32.totalorder %s31, %s32
      %p46 = scmp.eq.s32.totalorder %s24, 1
      %p47 = por %p45, %p46
      %p49 = scmp.ne.s32.totalorder %s32, %s48
      %p50 = scmp.eq.s32.totalorder %s24, 0
      %p51 = por %p49, %p50
      %s53 = sadd.s32 %s52, 1
      %p56 = scmp.eq.s32.totalorder %s18, 1
      %p57 = scmp.ne.s32.totalorder %s52, %s54
      %p58 = scmp.eq.s32.totalorder %s18, 0
      %p59 = por %p57, %p58
      %p60 = scmp.ne.s32.totalorder %s52, %s54
      %p61 = scmp.eq.s32.totalorder %s23, 1
      %p62 = por %p60, %p61
      %p63 = scmp.ne.s32.totalorder %s54, %s55
      %p64 = scmp.eq.s32.totalorder %s23, 0
      %p65 = por %p63, %p64
      %p66 = scmp.ne.s32.totalorder %s54, %s55
      %p67 = scmp.eq.s32.totalorder %s24, 1
      %p68 = por %p66, %p67
      %p70 = scmp.ne.s32.totalorder %s55, %s69
      %p71 = scmp.eq.s32.totalorder %s24, 0
      %p72 = por %p70, %p71
      %s74 = sadd.s32 %s73, 1
      %p77 = scmp.eq.s32.totalorder %s18, 1
      %p78 = scmp.ne.s32.totalorder %s73, %s75
      %p79 = scmp.eq.s32.totalorder %s18, 0
      %p80 = por %p78, %p79
      %p81 = scmp.ne.s32.totalorder %s73, %s75
      %p82 = scmp.eq.s32.totalorder %s23, 1
      %p83 = por %p81, %p82
      %p84 = scmp.ne.s32.totalorder %s75, %s76
      %p85 = scmp.eq.s32.totalorder %s23, 0
      %p86 = por %p84, %p85
      %p87 = scmp.ne.s32.totalorder %s75, %s76
      %p88 = scmp.eq.s32.totalorder %s24, 1
      %p89 = por %p87, %p88
      %p91 = scmp.ne.s32.totalorder %s76, %s90
      %p92 = scmp.eq.s32.totalorder %s24, 0
      %p93 = por %p91, %p92
      %s95 = sadd.s32 %s94, 1
      %p98 = scmp.eq.s32.totalorder %s18, 1
      %p99 = scmp.ne.s32.totalorder %s94, %s96
      %p100 = scmp.eq.s32.totalorder %s18, 0
      %p101 = por %p99, %p100
      %p102 = scmp.ne.s32.totalorder %s94, %s96
      %p103 = scmp.eq.s32.totalorder %s23, 1
      %p104 = por %p102, %p103
      %p105 = scmp.ne.s32.totalorder %s96, %s97
      %p106 = scmp.eq.s32.totalorder %s23, 0
      %p107 = por %p105, %p106
      %p108 = scmp.ne.s32.totalorder %s96, %s97
      %p109 = scmp.eq.s32.totalorder %s24, 1
      %p110 = por %p108, %p109
      %p112 = scmp.ne.s32.totalorder %s97, %s111
      %p113 = scmp.eq.s32.totalorder %s24, 0
      %p114 = por %p112, %p113
      %s116 = sadd.s32 %s115, 1
      %p119 = scmp.eq.s32.totalorder %s18, 1
      %p120 = scmp.ne.s32.totalorder %s115, %s117
      %p121 = scmp.eq.s32.totalorder %s18, 0
      %p122 = por %p120, %p121
      %p123 = scmp.ne.s32.totalorder %s115, %s117
      %p124 = scmp.eq.s32.totalorder %s23, 1
      %p125 = por %p123, %p124
      %p126 = scmp.ne.s32.totalorder %s117, %s118
      %p127 = scmp.eq.s32.totalorder %s23, 0
      %p128 = por %p126, %p127
      %p129 = scmp.ne.s32.totalorder %s117, %s118
      %p130 = scmp.eq.s32.totalorder %s24, 1
      %p131 = por %p129, %p130
      %p133 = scmp.ne.s32.totalorder %s118, %s132
      %p134 = scmp.eq.s32.totalorder %s24, 0
      %p135 = por %p133, %p134
      %s136 = ssub.s32 %s18, %s25
      %p137 = scmp.eq.s32.totalorder %s136, 0
      %s139 = sadd.s32 %s138, 1
      %s140 = scalar_select %p137, %s138, %s139
      %p143 = pneg %p137
      %p144 = scmp.eq.s32.totalorder %s18, 1
      %p145 = por %p143, %p144
      %p146 = scmp.ne.s32.totalorder %s138, %s141
      %p147 = scmp.eq.s32.totalorder %s18, 0
      %p148 = por %p146, %p147
      %p149 = scmp.ne.s32.totalorder %s138, %s141
      %p150 = scmp.eq.s32.totalorder %s23, 1
      %p151 = por %p149, %p150
      %p152 = scmp.ne.s32.totalorder %s141, %s142
      %p153 = scmp.eq.s32.totalorder %s23, 0
      %p154 = por %p152, %p153
      %p155 = scmp.ne.s32.totalorder %s141, %s142
      %p156 = scmp.eq.s32.totalorder %s24, 1
      %p157 = por %p155, %p156
      %p159 = scmp.ne.s32.totalorder %s142, %s158
      %p160 = scmp.eq.s32.totalorder %s24, 0
      %p161 = por %p159, %p160
      %p162 = scmp.le.s32.totalorder 1, %s18
      %p163 = scmp.lt.s32.totalorder %s18, 3
      %p164 = pnand %p162, %p163
      %p165 = pneg %p164
      // Predicated region
      $region9: #{tpu_custom_call.1} parent=5 // pred_check
        _
      $region10: #{tpu_custom_call.1} parent=5 // pred_check_branch
        %167 = sbr.rel (%p164) target = $region12
      $region11: #{tpu_custom_call.1} parent=5 // pred_region
        %s168 = ssub.s32 %s18, 1
        // Predicated region
        $region13: #{tpu_custom_call.1} parent=11 // pred_check
          %p169 = pneg %p65
        $region14: #{tpu_custom_call.1} parent=11 // pred_check_branch
          %171 = sbr.rel (%p169) target = $region16
        $region15: #{tpu_custom_call.1} parent=11 // pred_region
          %173 = vsyncadd [#allocation6], 0
          %s174 = sshll.u32 %s1, 4
          %s175 = int_to_ptr.hbm [resolvable:$true] %s174
          %s176 = sshll.u32 [#allocation5], 4
          %s177 = int_to_ptr.vmem [resolvable:$true] %s176
          %182 = dma.hbm_to_vmem [thread:$0]  %s175, 2048, %s177, [#allocation6], 128, 128, 8
        $region16: #{tpu_custom_call.1} parent=11 // pred_fallthru
          _
        // Predicated region
        $region17: #{tpu_custom_call.1} parent=11 // pred_check
          %p183 = pneg %p86
        $region18: #{tpu_custom_call.1} parent=11 // pred_check_branch
          %185 = sbr.rel (%p183) target = $region20
        $region19: #{tpu_custom_call.1} parent=11 // pred_region
          _
        $region20: #{tpu_custom_call.1} parent=11 // pred_fallthru
          _
        // Predicated region
        $region21: #{tpu_custom_call.1} parent=11 // pred_check
          %p186 = pneg %p107
        $region22: #{tpu_custom_call.1} parent=11 // pred_check_branch
          %188 = sbr.rel (%p186) target = $region24
        $region23: #{tpu_custom_call.1} parent=11 // pred_region
          %190 = vsyncadd [#allocation6], 0
          %s191 = sshll.u32 %s3, 4
          %s192 = int_to_ptr.hbm [resolvable:$true] %s191
          %s193 = sshll.u32 [#allocation7], 4
          %s194 = int_to_ptr.vmem [resolvable:$true] %s193
          %199 = dma.hbm_to_vmem [thread:$0]  %s192, 2048, %s194, [#allocation6], 128, 128, 8
        $region24: #{tpu_custom_call.1} parent=11 // pred_fallthru
          _
        // Predicated region
        $region25: #{tpu_custom_call.1} parent=11 // pred_check
          %p200 = pneg %p128
        $region26: #{tpu_custom_call.1} parent=11 // pred_check_branch
          %202 = sbr.rel (%p200) target = $region28
        $region27: #{tpu_custom_call.1} parent=11 // pred_region
          _
        $region28: #{tpu_custom_call.1} parent=11 // pred_fallthru
          _
      $region12: #{tpu_custom_call.1} parent=5 // pred_fallthru
        _
      %p203 = scmp.lt.s32.totalorder %s18, 2
      // Predicated region
      $region29: #{tpu_custom_call.1} parent=5 // pred_check
        %p204 = pneg %p203
      $region30: #{tpu_custom_call.1} parent=5 // pred_check_branch
        %206 = sbr.rel (%p204) target = $region32
      $region31: #{tpu_custom_call.1} parent=5 // pred_region
        // Predicated region
        $region33: #{tpu_custom_call.1} parent=31 // pred_check
          %p207 = pneg %p38
        $region34: #{tpu_custom_call.1} parent=31 // pred_check_branch
          %209 = sbr.rel (%p207) target = $region36
        $region35: #{tpu_custom_call.1} parent=31 // pred_region
          %s210 = sand.u32 %s28, 1
          %s211 = scalar_lea.sflag [#allocation3], %s210
          %s212 = sand.u32 %s28, 1
          %s213 = smul.addr %s212, 32
          %s214 = scalar_lea.vmem [#allocation2], %s213
          %s215 = smul.u32 4, %s18
          %217 = vsyncadd %s211, 0
          %s218 = smul.addr %s215, 8
          %s219 = scalar_lea.hbm %s0, %s218
          %s220 = sshll.u32 %s219, 4
          %s221 = int_to_ptr.hbm [resolvable:$true] %s220
          %s222 = sshll.u32 %s214, 4
          %s223 = int_to_ptr.vmem [resolvable:$true] %s222
          %228 = dma.hbm_to_vmem [thread:$0]  %s221, 512, %s223, %s211, 128, 128, 8
        $region36: #{tpu_custom_call.1} parent=31 // pred_fallthru
          _
      $region32: #{tpu_custom_call.1} parent=5 // pred_fallthru
        _
      %p229 = scmp.le.s32.totalorder 1, %s18
      %p230 = scmp.lt.s32.totalorder %s18, 3
      %p231 = pnand %p229, %p230
      %p232 = pneg %p231
      // Predicated region
      $region37: #{tpu_custom_call.1} parent=5 // pred_check
        _
      $region38: #{tpu_custom_call.1} parent=5 // pred_check_branch
        %234 = sbr.rel (%p231) target = $region40
      $region39: #{tpu_custom_call.1} parent=5 // pred_region
        %s235 = ssub.s32 %s18, 1
        %s236 = sand.u32 %s31, 1
        %s237 = scalar_lea.sflag [#allocation3], %s236
        %s238 = sand.u32 %s31, 1
        %s239 = smul.addr %s238, 32
        %s240 = scalar_lea.vmem [#allocation2], %s239
        // Predicated region
        $region41: #{tpu_custom_call.1} parent=39 // pred_check
          %p241 = pneg %p44
        $region42: #{tpu_custom_call.1} parent=39 // pred_check_branch
          %243 = sbr.rel (%p241) target = $region44
        $region43: #{tpu_custom_call.1} parent=39 // pred_region
          %245 = dma.done %s237, 512
        $region44: #{tpu_custom_call.1} parent=39 // pred_fallthru
          _
        // Predicated region
        $region45: #{tpu_custom_call.1} parent=39 // pred_check
          %p246 = pneg %p65
        $region46: #{tpu_custom_call.1} parent=39 // pred_check_branch
          %248 = sbr.rel (%p246) target = $region48
        $region47: #{tpu_custom_call.1} parent=39 // pred_region
          %250 = dma.done [#allocation6], 2048
        $region48: #{tpu_custom_call.1} parent=39 // pred_fallthru
          _
        // Predicated region
        $region49: #{tpu_custom_call.1} parent=39 // pred_check
          %p251 = pneg %p107
        $region50: #{tpu_custom_call.1} parent=39 // pred_check_branch
          %253 = sbr.rel (%p251) target = $region52
        $region51: #{tpu_custom_call.1} parent=39 // pred_region
          %255 = dma.done [#allocation6], 2048
        $region52: #{tpu_custom_call.1} parent=39 // pred_fallthru
          _
        %s256 = sand.u32 %s31, 1
        %s257 = scalar_lea.sflag [#allocation3], %s256
        %s258 = sand.u32 %s31, 1
        %s259 = smul.addr %s258, 32
        %s260 = scalar_lea.vmem [#allocation2], %s259
        %p261 = pneg %p44
        %p262 = pneg %p41
        %p263 = pneg %p65
        %p264 = pneg %p62
        %p265 = pneg %p86
        %p266 = pneg %p83
        %p267 = pneg %p107
        %p268 = pneg %p104
        %p269 = pneg %p128
        %p270 = pneg %p125
        %p271 = pneg %p154
        %p272 = pneg %p151
        %s273 = sand.u32 %s141, 1
        %s274 = scalar_lea.sflag [#allocation4], %s273
        %s275 = sand.u32 %s141, 1
        %s276 = smul.addr %s275, 32
        %s277 = scalar_lea.vmem [#allocation8], %s276
        %s278 = smul.u32 4, %s23
        %s279 = smul.u32 4, %s23
        %v280 = vld [vmem:[%s240] sm:$0xff]
        %v281 = vld [vmem:[%s240 + $0x8] sm:$0xff]
        %v282 = vld [vmem:[%s240 + $0x10] sm:$0xff]
        %v283 = vld [vmem:[%s240 + $0x18] sm:$0xff]
        %v284 = vld [vmem:[#allocation5] sm:$0xff]
        %v285 = vld [vmem:[#allocation5 + $0x8] sm:$0xff]
        %v286 = vld [vmem:[#allocation5 + $0x10] sm:$0xff]
        %v287 = vld [vmem:[#allocation5 + $0x18] sm:$0xff]
        %v288 = vld [vmem:[#allocation5 + $0x20] sm:$0xff]
        %v289 = vld [vmem:[#allocation5 + $0x28] sm:$0xff]
        %v290 = vld [vmem:[#allocation5 + $0x30] sm:$0xff]
        %v291 = vld [vmem:[#allocation5 + $0x38] sm:$0xff]
        %v292 = vld [vmem:[#allocation5 + $0x40] sm:$0xff]
        %v293 = vld [vmem:[#allocation5 + $0x48] sm:$0xff]
        %v294 = vld [vmem:[#allocation5 + $0x50] sm:$0xff]
        %v295 = vld [vmem:[#allocation5 + $0x58] sm:$0xff]
        %v296 = vld [vmem:[#allocation5 + $0x60] sm:$0xff]
        %v297 = vld [vmem:[#allocation5 + $0x68] sm:$0xff]
        %v298 = vld [vmem:[#allocation5 + $0x70] sm:$0xff]
        %v299 = vld [vmem:[#allocation5 + $0x78] sm:$0xff]
        %v300 = vld [vmem:[%s2] sm:$0x1]
        %v302 = vperm.slane %v300, 0
        %304 = vmatpush.msra.mxu0 %v299
        %305 = vmatpush.msra.mxu0 %v298
        %306 = vmatpush.msra.mxu0 %v297
        %307 = vmatpush.msra.mxu0 %v296
        %308 = vmatpush.msra.mxu0 %v295
        %309 = vmatpush.msra.mxu0 %v294
        %310 = vmatpush.msra.mxu0 %v293
        %311 = vmatpush.msra.mxu0 %v292
        %312 = vmatpush.msra.mxu0 %v291
        %313 = vmatpush.msra.mxu0 %v290
        %314 = vmatpush.msra.mxu0 %v289
        %315 = vmatpush.msra.mxu0 %v288
        %316 = vmatpush.msra.mxu0 %v287
        %317 = vmatpush.msra.mxu0 %v286
        %318 = vmatpush.msra.mxu0 %v285
        %319 = vmatpush.msra.mxu0 %v284
        %320 = vmatmul.f32.gmra.mxu0 %v280
        %v321 = vpop.f32.mrf.mxu0
        %v322 = vadd.f32 %v302, %v321
        %323 = vmatmul.f32.gmra.mxu0 %v281
        %v324 = vpop.f32.mrf.mxu0
        %v325 = vadd.f32 %v302, %v324
        %326 = vmatmul.f32.gmra.mxu0 %v282
        %v327 = vpop.f32.mrf.mxu0
        %v328 = vadd.f32 %v302, %v327
        %329 = vmatmul.f32.gmra.mxu0 %v283
        %v330 = vpop.f32.mrf.mxu0
        %v331 = vadd.f32 %v302, %v330
        %332 = vdwg.mxu0
        %vm333 = vcmp.gt.f32.partialorder %v322, 0.0
        %vm334 = vcmp.gt.f32.partialorder %v325, 0.0
        %vm335 = vcmp.gt.f32.partialorder %v328, 0.0
        %vm336 = vcmp.gt.f32.partialorder %v331, 0.0
        %v337 = vmul.f32 %v322, 0.01
        %v338 = vmul.f32 %v325, 0.01
        %v339 = vmul.f32 %v328, 0.01
        %v340 = vmul.f32 %v331, 0.01
        %v341 = vsel %vm333, %v322, %v337
        %v342 = vsel %vm334, %v325, %v338
        %v343 = vsel %vm335, %v328, %v339
        %v344 = vsel %vm336, %v331, %v340
        %v345 = vld [vmem:[#allocation7] sm:$0xff]
        %v346 = vld [vmem:[#allocation7 + $0x8] sm:$0xff]
        %v347 = vld [vmem:[#allocation7 + $0x10] sm:$0xff]
        %v348 = vld [vmem:[#allocation7 + $0x18] sm:$0xff]
        %v349 = vld [vmem:[#allocation7 + $0x20] sm:$0xff]
        %v350 = vld [vmem:[#allocation7 + $0x28] sm:$0xff]
        %v351 = vld [vmem:[#allocation7 + $0x30] sm:$0xff]
        %v352 = vld [vmem:[#allocation7 + $0x38] sm:$0xff]
        %v353 = vld [vmem:[#allocation7 + $0x40] sm:$0xff]
        %v354 = vld [vmem:[#allocation7 + $0x48] sm:$0xff]
        %v355 = vld [vmem:[#allocation7 + $0x50] sm:$0xff]
        %v356 = vld [vmem:[#allocation7 + $0x58] sm:$0xff]
        %v357 = vld [vmem:[#allocation7 + $0x60] sm:$0xff]
        %v358 = vld [vmem:[#allocation7 + $0x68] sm:$0xff]
        %v359 = vld [vmem:[#allocation7 + $0x70] sm:$0xff]
        %v360 = vld [vmem:[#allocation7 + $0x78] sm:$0xff]
        %v361 = vld [vmem:[%s4] sm:$0x1]
        %v363 = vperm.slane %v361, 0
        %365 = vmatpush.msra.mxu0 %v360
        %366 = vmatpush.msra.mxu0 %v359
        %367 = vmatpush.msra.mxu0 %v358
        %368 = vmatpush.msra.mxu0 %v357
        %369 = vmatpush.msra.mxu0 %v356
        %370 = vmatpush.msra.mxu0 %v355
        %371 = vmatpush.msra.mxu0 %v354
        %372 = vmatpush.msra.mxu0 %v353
        %373 = vmatpush.msra.mxu0 %v352
        %374 = vmatpush.msra.mxu0 %v351
        %375 = vmatpush.msra.mxu0 %v350
        %376 = vmatpush.msra.mxu0 %v349
        %377 = vmatpush.msra.mxu0 %v348
        %378 = vmatpush.msra.mxu0 %v347
        %379 = vmatpush.msra.mxu0 %v346
        %380 = vmatpush.msra.mxu0 %v345
        %381 = vmatmul.f32.gmra.mxu0 %v341
        %v382 = vpop.f32.mrf.mxu0
        %v383 = vadd.f32 %v363, %v382
        %384 = vmatmul.f32.gmra.mxu0 %v342
        %v385 = vpop.f32.mrf.mxu0
        %v386 = vadd.f32 %v363, %v385
        %387 = vmatmul.f32.gmra.mxu0 %v343
        %v388 = vpop.f32.mrf.mxu0
        %v389 = vadd.f32 %v363, %v388
        %390 = vmatmul.f32.gmra.mxu0 %v344
        %v391 = vpop.f32.mrf.mxu0
        %v392 = vadd.f32 %v363, %v391
        %393 = vdwg.mxu0
        %vm394 = vcmp.gt.f32.partialorder %v383, 0.0
        %vm395 = vcmp.gt.f32.partialorder %v386, 0.0
        %vm396 = vcmp.gt.f32.partialorder %v389, 0.0
        %vm397 = vcmp.gt.f32.partialorder %v392, 0.0
        %v398 = vmul.f32 %v383, 0.01
        %v399 = vmul.f32 %v386, 0.01
        %v400 = vmul.f32 %v389, 0.01
        %v401 = vmul.f32 %v392, 0.01
        %v402 = vsel %vm394, %v383, %v398
        %v403 = vsel %vm395, %v386, %v399
        %v404 = vsel %vm396, %v389, %v400
        %v405 = vsel %vm397, %v392, %v401
        %406 = vst [vmem:[%s277] sm:$0xff] %v402
        %407 = vst [vmem:[%s277 + $0x8] sm:$0xff] %v403
        %408 = vst [vmem:[%s277 + $0x10] sm:$0xff] %v404
        %409 = vst [vmem:[%s277 + $0x18] sm:$0xff] %v405
        %s410 = sand.u32 %s141, 1
        %s411 = scalar_lea.sflag [#allocation4], %s410
        %s412 = sand.u32 %s141, 1
        %s413 = smul.addr %s412, 32
        %s414 = scalar_lea.vmem [#allocation8], %s413
        // Predicated region
        $region53: #{tpu_custom_call.1} parent=39 // pred_check
          %p415 = pneg %p151
        $region54: #{tpu_custom_call.1} parent=39 // pred_check_branch
          %417 = sbr.rel (%p415) target = $region56
        $region55: #{tpu_custom_call.1} parent=39 // pred_region
          %s418 = smul.u32 4, %s23
          %420 = vsyncadd %s411, 0
          %s421 = smul.addr %s418, 8
          %s422 = scalar_lea.hbm %s5, %s421
          %s423 = sshll.u32 %s414, 4
          %s424 = int_to_ptr.vmem [resolvable:$true] %s423
          %s425 = sshll.u32 %s422, 4
          %s426 = int_to_ptr.hbm [resolvable:$true] %s425
          %431 = dma.vmem_to_hbm [thread:$0]  %s424, 512, %s426, %s411, 128, 128, 8
        $region56: #{tpu_custom_call.1} parent=39 // pred_fallthru
          _
      $region40: #{tpu_custom_call.1} parent=5 // pred_fallthru
        _
      %p432 = scmp.le.s32.totalorder 2, %s18
      // Predicated region
      $region57: #{tpu_custom_call.1} parent=5 // pred_check
        %p433 = pneg %p432
      $region58: #{tpu_custom_call.1} parent=5 // pred_check_branch
        %435 = sbr.rel (%p433) target = $region60
      $region59: #{tpu_custom_call.1} parent=5 // pred_region
        %s436 = ssub.s32 %s18, 2
        // Predicated region
        $region61: #{tpu_custom_call.1} parent=59 // pred_check
          %p437 = pneg %p157
        $region62: #{tpu_custom_call.1} parent=59 // pred_check_branch
          %439 = sbr.rel (%p437) target = $region64
        $region63: #{tpu_custom_call.1} parent=59 // pred_region
          %s440 = sand.u32 %s142, 1
          %s441 = scalar_lea.sflag [#allocation4], %s440
          %s442 = sand.u32 %s142, 1
          %s443 = smul.addr %s442, 32
          %s444 = scalar_lea.vmem [#allocation8], %s443
          %446 = dma.done %s441, 512
        $region64: #{tpu_custom_call.1} parent=59 // pred_fallthru
          _
      $region60: #{tpu_custom_call.1} parent=5 // pred_fallthru
        _
    $region6: #{tpu_custom_call.1} parent=1 // loop_footer
      %s22 = sadd.s32 1, %s18
    $region7: #{tpu_custom_call.1} parent=1 // loop_footer_branch
      %17 = sbr.rel target = $region3
    $region8: #{tpu_custom_call.1} parent=1 // loop_exit
      _
    %447 = vsyncpa [#allocation3], 1
    %s448 = scalar_lea.sflag [#allocation3], 1
    %449 = vsyncpa %s448, 1
    %450 = vsyncpa [#allocation6], 1
    %451 = vsyncpa [#allocation4], 1
    %s452 = scalar_lea.sflag [#allocation4], 1
    %453 = vsyncpa %s452, 1

// kernel: tpu_custom_call.1
$region0: #{tpu_custom_call.1}
  #allocation0 [shape = 'u32[]', space=smem, size = 0x4, offset = 0x4, fixed_abs, tag = 'smem constant byte address 0x4 - core index']
  #allocation1 [shape = 'u32[72,128]{1,0:T(1,128)}', space=vmem, size = 0x9000, scoped, tag = 'internal scratch']
  %s0 = inlined_call_operand.hbm [shape: f32[64,128], index: 0, kind: input, shape index: {}]
  %s1 = inlined_call_operand.hbm [shape: f32[128,128], index: 1, kind: input, shape index: {}]
  %s2 = inlined_call_operand.vmem [shape: f32[1,128], index: 2, kind: input, shape index: {}]
  %s3 = inlined_call_operand.hbm [shape: f32[128,128], index: 3, kind: input, shape index: {}]
  %s4 = inlined_call_operand.vmem [shape: f32[1,128], index: 4, kind: input, shape index: {}]
  %s5 = inlined_call_operand.hbm [shape: f32[64,128], index: 5, kind: output, shape index: {}]
  %s6 = sld [smem:[#allocation0]]
  $region65: #{tpu_custom_call.1} parent=0
    _
  %s8 = ssub.s32 1, %s6
  %s9 = scalar_select 0, %s8, %s6
  $region1: #{tpu_custom_call.1} parent=0
    #allocation2 [shape = 'u8[32768]{0}', space=vmem, size = 0x8000, scoped, tag = 'input window, operand 0']
    #allocation3 [shape = 's32[2]{0}', space=sflag, size = 0x8, scoped, tag = 'scoped memory for tpu_custom_call.1']
    #allocation4 [shape = 's32[2]{0}', space=sflag, size = 0x8, scoped, tag = 'scoped memory for tpu_custom_call.1']
    #allocation5 [shape = 'u8[65536]{0}', space=vmem, size = 0x10000, scoped, tag = 'input window, operand 1, single buffered']
    #allocation6 [shape = 's32[1]{0}', space=sflag, size = 0x4, scoped, tag = 'scoped memory for tpu_custom_call.1']
    #allocation7 [shape = 'u8[65536]{0}', space=vmem, size = 0x10000, scoped, tag = 'input window, operand 3, single buffered']
    #allocation8 [shape = 'u8[32768]{0}', space=vmem, size = 0x8000, scoped, tag = 'output window, operand 0']
    %10 = vsyncpa [#allocation3], 0
    %s11 = scalar_lea.sflag [#allocation3], 1
    %12 = vsyncpa %s11, 0
    %13 = vsyncpa [#allocation6], 0
    %14 = vsyncpa [#allocation4], 0
    %s15 = scalar_lea.sflag [#allocation4], 1
    %16 = vsyncpa %s15, 0
    loop: start=0, step=1, limit=4
    $region2: #{tpu_custom_call.1} parent=1 // loop_pre_header
      _
    $region3: #{tpu_custom_call.1} parent=1 // loop_header
      %s18 = sphi 0, %s22
      %p19 = scmp.ge.s32.totalorder %s18, 4
      %s28 = sphi 0, %s30
      %s31 = sphi 0, %s28
      %s32 = sphi 0, %s31
      %s48 = sphi 0, %s32
      %s52 = sphi 0, %s52
      %s54 = sphi 0, %s52
      %s55 = sphi 0, %s54
      %s69 = sphi 0, %s55
      %s73 = sphi 0, %s73
      %s75 = sphi 0, %s73
      %s76 = sphi 0, %s75
      %s90 = sphi 0, %s76
      %s94 = sphi 0, %s94
      %s96 = sphi 0, %s94
      %s97 = sphi 0, %s96
      %s111 = sphi 0, %s97
      %s115 = sphi 0, %s115
      %s117 = sphi 0, %s115
      %s118 = sphi 0, %s117
      %s132 = sphi 0, %s118
      %s138 = sphi 0, %s140
      %s141 = sphi 0, %s138
      %s142 = sphi 0, %s141
      %s158 = sphi 0, %s142
    $region4: #{tpu_custom_call.1} parent=1 // loop_header_branch
      %21 = sbr.rel (%p19) target = $region8
    $region5: #{tpu_custom_call.1} parent=1 // loop_body
      %s23 = ssub.s32 %s18, 1
      %s24 = ssub.s32 %s18, 2
      %s25 = sadd.s32 %s18, 1
      %s26 = ssub.s32 %s18, %s25
      %p27 = scmp.eq.s32.totalorder %s26, 0
      %s29 = sadd.s32 %s28, 1
      %s30 = scalar_select %p27, %s28, %s29
      %p33 = pneg %p27
      %p34 = scmp.eq.s32.totalorder %s18, 1
      %p35 = por %p33, %p34
      %p36 = scmp.ne.s32.totalorder %s28, %s31
      %p37 = scmp.eq.s32.totalorder %s18, 0
      %p38 = por %p36, %p37
      %p39 = scmp.ne.s32.totalorder %s28, %s31
      %p40 = scmp.eq.s32.totalorder %s23, 1
      %p41 = por %p39, %p40
      %p42 = scmp.ne.s32.totalorder %s31, %s32
      %p43 = scmp.eq.s32.totalorder %s23, 0
      %p44 = por %p42, %p43
      %p45 = scmp.ne.s32.totalorder %s31, %s32
      %p46 = scmp.eq.s32.totalorder %s24, 1
      %p47 = por %p45, %p46
      %p49 = scmp.ne.s32.totalorder %s32, %s48
      %p50 = scmp.eq.s32.totalorder %s24, 0
      %p51 = por %p49, %p50
      %s53 = sadd.s32 %s52, 1
      %p56 = scmp.eq.s32.totalorder %s18, 1
      %p57 = scmp.ne.s32.totalorder %s52, %s54
      %p58 = scmp.eq.s32.totalorder %s18, 0
      %p59 = por %p57, %p58
      %p60 = scmp.ne.s32.totalorder %s52, %s54
      %p61 = scmp.eq.s32.totalorder %s23, 1
      %p62 = por %p60, %p61
      %p63 = scmp.ne.s32.totalorder %s54, %s55
      %p64 = scmp.eq.s32.totalorder %s23, 0
      %p65 = por %p63, %p64
      %p66 = scmp.ne.s32.totalorder %s54, %s55
      %p67 = scmp.eq.s32.totalorder %s24, 1
      %p68 = por %p66, %p67
      %p70 = scmp.ne.s32.totalorder %s55, %s69
      %p71 = scmp.eq.s32.totalorder %s24, 0
      %p72 = por %p70, %p71
      %s74 = sadd.s32 %s73, 1
      %p77 = scmp.eq.s32.totalorder %s18, 1
      %p78 = scmp.ne.s32.totalorder %s73, %s75
      %p79 = scmp.eq.s32.totalorder %s18, 0
      %p80 = por %p78, %p79
      %p81 = scmp.ne.s32.totalorder %s73, %s75
      %p82 = scmp.eq.s32.totalorder %s23, 1
      %p83 = por %p81, %p82
      %p84 = scmp.ne.s32.totalorder %s75, %s76
      %p85 = scmp.eq.s32.totalorder %s23, 0
      %p86 = por %p84, %p85
      %p87 = scmp.ne.s32.totalorder %s75, %s76
      %p88 = scmp.eq.s32.totalorder %s24, 1
      %p89 = por %p87, %p88
      %p91 = scmp.ne.s32.totalorder %s76, %s90
      %p92 = scmp.eq.s32.totalorder %s24, 0
      %p93 = por %p91, %p92
      %s95 = sadd.s32 %s94, 1
      %p98 = scmp.eq.s32.totalorder %s18, 1
      %p99 = scmp.ne.s32.totalorder %s94, %s96
      %p100 = scmp.eq.s32.totalorder %s18, 0
      %p101 = por %p99, %p100
      %p102 = scmp.ne.s32.totalorder %s94, %s96
      %p103 = scmp.eq.s32.totalorder %s23, 1
      %p104 = por %p102, %p103
      %p105 = scmp.ne.s32.totalorder %s96, %s97
      %p106 = scmp.eq.s32.totalorder %s23, 0
      %p107 = por %p105, %p106
      %p108 = scmp.ne.s32.totalorder %s96, %s97
      %p109 = scmp.eq.s32.totalorder %s24, 1
      %p110 = por %p108, %p109
      %p112 = scmp.ne.s32.totalorder %s97, %s111
      %p113 = scmp.eq.s32.totalorder %s24, 0
      %p114 = por %p112, %p113
      %s116 = sadd.s32 %s115, 1
      %p119 = scmp.eq.s32.totalorder %s18, 1
      %p120 = scmp.ne.s32.totalorder %s115, %s117
      %p121 = scmp.eq.s32.totalorder %s18, 0
      %p122 = por %p120, %p121
      %p123 = scmp.ne.s32.totalorder %s115, %s117
      %p124 = scmp.eq.s32.totalorder %s23, 1
      %p125 = por %p123, %p124
      %p126 = scmp.ne.s32.totalorder %s117, %s118
      %p127 = scmp.eq.s32.totalorder %s23, 0
      %p128 = por %p126, %p127
      %p129 = scmp.ne.s32.totalorder %s117, %s118
      %p130 = scmp.eq.s32.totalorder %s24, 1
      %p131 = por %p129, %p130
      %p133 = scmp.ne.s32.totalorder %s118, %s132
      %p134 = scmp.eq.s32.totalorder %s24, 0
      %p135 = por %p133, %p134
      %s136 = ssub.s32 %s18, %s25
      %p137 = scmp.eq.s32.totalorder %s136, 0
      %s139 = sadd.s32 %s138, 1
      %s140 = scalar_select %p137, %s138, %s139
      %p143 = pneg %p137
      %p144 = scmp.eq.s32.totalorder %s18, 1
      %p145 = por %p143, %p144
      %p146 = scmp.ne.s32.totalorder %s138, %s141
      %p147 = scmp.eq.s32.totalorder %s18, 0
      %p148 = por %p146, %p147
      %p149 = scmp.ne.s32.totalorder %s138, %s141
      %p150 = scmp.eq.s32.totalorder %s23, 1
      %p151 = por %p149, %p150
      %p152 = scmp.ne.s32.totalorder %s141, %s142
      %p153 = scmp.eq.s32.totalorder %s23, 0
      %p154 = por %p152, %p153
      %p155 = scmp.ne.s32.totalorder %s141, %s142
      %p156 = scmp.eq.s32.totalorder %s24, 1
      %p157 = por %p155, %p156
      %p159 = scmp.ne.s32.totalorder %s142, %s158
      %p160 = scmp.eq.s32.totalorder %s24, 0
      %p161 = por %p159, %p160
      %p162 = scmp.le.s32.totalorder 1, %s18
      %p163 = scmp.lt.s32.totalorder %s18, 3
      %p164 = pnand %p162, %p163
      %p165 = pneg %p164
      // Predicated region
      $region9: #{tpu_custom_call.1} parent=5 // pred_check
        _
      $region10: #{tpu_custom_call.1} parent=5 // pred_check_branch
        %167 = sbr.rel (%p164) target = $region12
      $region11: #{tpu_custom_call.1} parent=5 // pred_region
        %s168 = ssub.s32 %s18, 1
        // Predicated region
        $region13: #{tpu_custom_call.1} parent=11 // pred_check
          %p169 = pneg %p65
        $region14: #{tpu_custom_call.1} parent=11 // pred_check_branch
          %171 = sbr.rel (%p169) target = $region16
        $region15: #{tpu_custom_call.1} parent=11 // pred_region
          %173 = vsyncadd [#allocation6], 0
          %s174 = sshll.u32 %s1, 4
          %s175 = int_to_ptr.hbm [resolvable:$true] %s174
          %s176 = sshll.u32 [#allocation5], 4
          %s177 = int_to_ptr.vmem [resolvable:$true] %s176
          %182 = dma.hbm_to_vmem [thread:$0]  %s175, 2048, %s177, [#allocation6], 128, 128, 8
        $region16: #{tpu_custom_call.1} parent=11 // pred_fallthru
          _
        // Predicated region
        $region17: #{tpu_custom_call.1} parent=11 // pred_check
          %p183 = pneg %p86
        $region18: #{tpu_custom_call.1} parent=11 // pred_check_branch
          %185 = sbr.rel (%p183) target = $region20
        $region19: #{tpu_custom_call.1} parent=11 // pred_region
          _
        $region20: #{tpu_custom_call.1} parent=11 // pred_fallthru
          _
        // Predicated region
        $region21: #{tpu_custom_call.1} parent=11 // pred_check
          %p186 = pneg %p107
        $region22: #{tpu_custom_call.1} parent=11 // pred_check_branch
          %188 = sbr.rel (%p186) target = $region24
        $region23: #{tpu_custom_call.1} parent=11 // pred_region
          %190 = vsyncadd [#allocation6], 0
          %s191 = sshll.u32 %s3, 4
          %s192 = int_to_ptr.hbm [resolvable:$true] %s191
          %s193 = sshll.u32 [#allocation7], 4
          %s194 = int_to_ptr.vmem [resolvable:$true] %s193
          %199 = dma.hbm_to_vmem [thread:$0]  %s192, 2048, %s194, [#allocation6], 128, 128, 8
        $region24: #{tpu_custom_call.1} parent=11 // pred_fallthru
          _
        // Predicated region
        $region25: #{tpu_custom_call.1} parent=11 // pred_check
          %p200 = pneg %p128
        $region26: #{tpu_custom_call.1} parent=11 // pred_check_branch
          %202 = sbr.rel (%p200) target = $region28
        $region27: #{tpu_custom_call.1} parent=11 // pred_region
          _
        $region28: #{tpu_custom_call.1} parent=11 // pred_fallthru
          _
      $region12: #{tpu_custom_call.1} parent=5 // pred_fallthru
        _
      %p203 = scmp.lt.s32.totalorder %s18, 2
      // Predicated region
      $region29: #{tpu_custom_call.1} parent=5 // pred_check
        %p204 = pneg %p203
      $region30: #{tpu_custom_call.1} parent=5 // pred_check_branch
        %206 = sbr.rel (%p204) target = $region32
      $region31: #{tpu_custom_call.1} parent=5 // pred_region
        // Predicated region
        $region33: #{tpu_custom_call.1} parent=31 // pred_check
          %p207 = pneg %p38
        $region34: #{tpu_custom_call.1} parent=31 // pred_check_branch
          %209 = sbr.rel (%p207) target = $region36
        $region35: #{tpu_custom_call.1} parent=31 // pred_region
          %s210 = sand.u32 %s28, 1
          %s211 = scalar_lea.sflag [#allocation3], %s210
          %s212 = sand.u32 %s28, 1
          %s213 = smul.addr %s212, 32
          %s214 = scalar_lea.vmem [#allocation2], %s213
          %s215 = smul.u32 4, %s18
          %217 = vsyncadd %s211, 0
          %s218 = smul.addr %s215, 8
          %s219 = scalar_lea.hbm %s0, %s218
          %s220 = sshll.u32 %s219, 4
          %s221 = int_to_ptr.hbm [resolvable:$true] %s220
          %s222 = sshll.u32 %s214, 4
          %s223 = int_to_ptr.vmem [resolvable:$true] %s222
          %228 = dma.hbm_to_vmem [thread:$0]  %s221, 512, %s223, %s211, 128, 128, 8
        $region36: #{tpu_custom_call.1} parent=31 // pred_fallthru
          _
      $region32: #{tpu_custom_call.1} parent=5 // pred_fallthru
        _
      %p229 = scmp.le.s32.totalorder 1, %s18
      %p230 = scmp.lt.s32.totalorder %s18, 3
      %p231 = pnand %p229, %p230
      %p232 = pneg %p231
      // Predicated region
      $region37: #{tpu_custom_call.1} parent=5 // pred_check
        _
      $region38: #{tpu_custom_call.1} parent=5 // pred_check_branch
        %234 = sbr.rel (%p231) target = $region40
      $region39: #{tpu_custom_call.1} parent=5 // pred_region
        %s235 = ssub.s32 %s18, 1
        %s236 = sand.u32 %s31, 1
        %s237 = scalar_lea.sflag [#allocation3], %s236
        %s238 = sand.u32 %s31, 1
        %s239 = smul.addr %s238, 32
        %s240 = scalar_lea.vmem [#allocation2], %s239
        // Predicated region
        $region41: #{tpu_custom_call.1} parent=39 // pred_check
          %p241 = pneg %p44
        $region42: #{tpu_custom_call.1} parent=39 // pred_check_branch
          %243 = sbr.rel (%p241) target = $region44
        $region43: #{tpu_custom_call.1} parent=39 // pred_region
          %245 = dma.done %s237, 512
        $region44: #{tpu_custom_call.1} parent=39 // pred_fallthru
          _
        // Predicated region
        $region45: #{tpu_custom_call.1} parent=39 // pred_check
          %p246 = pneg %p65
        $region46: #{tpu_custom_call.1} parent=39 // pred_check_branch
          %248 = sbr.rel (%p246) target = $region48
        $region47: #{tpu_custom_call.1} parent=39 // pred_region
          %250 = dma.done [#allocation6], 2048
        $region48: #{tpu_custom_call.1} parent=39 // pred_fallthru
          _
        // Predicated region
        $region49: #{tpu_custom_call.1} parent=39 // pred_check
          %p251 = pneg %p107
        $region50: #{tpu_custom_call.1} parent=39 // pred_check_branch
          %253 = sbr.rel (%p251) target = $region52
        $region51: #{tpu_custom_call.1} parent=39 // pred_region
          %255 = dma.done [#allocation6], 2048
        $region52: #{tpu_custom_call.1} parent=39 // pred_fallthru
          _
        %s256 = sand.u32 %s31, 1
        %s257 = scalar_lea.sflag [#allocation3], %s256
        %s258 = sand.u32 %s31, 1
        %s259 = smul.addr %s258, 32
        %s260 = scalar_lea.vmem [#allocation2], %s259
        %p261 = pneg %p44
        %p262 = pneg %p41
        %p263 = pneg %p65
        %p264 = pneg %p62
        %p265 = pneg %p86
        %p266 = pneg %p83
        %p267 = pneg %p107
        %p268 = pneg %p104
        %p269 = pneg %p128
        %p270 = pneg %p125
        %p271 = pneg %p154
        %p272 = pneg %p151
        %s273 = sand.u32 %s141, 1
        %s274 = scalar_lea.sflag [#allocation4], %s273
        %s275 = sand.u32 %s141, 1
        %s276 = smul.addr %s275, 32
        %s277 = scalar_lea.vmem [#allocation8], %s276
        %s278 = smul.u32 4, %s23
        %s279 = smul.u32 4, %s23
        %v280 = vld [vmem:[%s240] sm:$0xff]
        %v281 = vld [vmem:[%s240 + $0x8] sm:$0xff]
        %v282 = vld [vmem:[%s240 + $0x10] sm:$0xff]
        %v283 = vld [vmem:[%s240 + $0x18] sm:$0xff]
        %v284 = vld [vmem:[#allocation5] sm:$0xff]
        %v285 = vld [vmem:[#allocation5 + $0x8] sm:$0xff]
        %v286 = vld [vmem:[#allocation5 + $0x10] sm:$0xff]
        %v287 = vld [vmem:[#allocation5 + $0x18] sm:$0xff]
        %v288 = vld [vmem:[#allocation5 + $0x20] sm:$0xff]
        %v289 = vld [vmem:[#allocation5 + $0x28] sm:$0xff]
        %v290 = vld [vmem:[#allocation5 + $0x30] sm:$0xff]
        %v291 = vld [vmem:[#allocation5 + $0x38] sm:$0xff]
        %v292 = vld [vmem:[#allocation5 + $0x40] sm:$0xff]
        %v293 = vld [vmem:[#allocation5 + $0x48] sm:$0xff]
        %v294 = vld [vmem:[#allocation5 + $0x50] sm:$0xff]
        %v295 = vld [vmem:[#allocation5 + $0x58] sm:$0xff]
        %v296 = vld [vmem:[#allocation5 + $0x60] sm:$0xff]
        %v297 = vld [vmem:[#allocation5 + $0x68] sm:$0xff]
        %v298 = vld [vmem:[#allocation5 + $0x70] sm:$0xff]
        %v299 = vld [vmem:[#allocation5 + $0x78] sm:$0xff]
        %v300 = vld [vmem:[%s2] sm:$0x1]
        %v302 = vperm.slane %v300, 0
        %304 = vmatpush.msra.mxu0 %v299
        %305 = vmatpush.msra.mxu0 %v298
        %306 = vmatpush.msra.mxu0 %v297
        %307 = vmatpush.msra.mxu0 %v296
        %308 = vmatpush.msra.mxu0 %v295
        %309 = vmatpush.msra.mxu0 %v294
        %310 = vmatpush.msra.mxu0 %v293
        %311 = vmatpush.msra.mxu0 %v292
        %312 = vmatpush.msra.mxu0 %v291
        %313 = vmatpush.msra.mxu0 %v290
        %314 = vmatpush.msra.mxu0 %v289
        %315 = vmatpush.msra.mxu0 %v288
        %316 = vmatpush.msra.mxu0 %v287
        %317 = vmatpush.msra.mxu0 %v286
        %318 = vmatpush.msra.mxu0 %v285
        %319 = vmatpush.msra.mxu0 %v284
        %320 = vmatmul.f32.gmra.mxu0 %v280
        %v321 = vpop.f32.mrf.mxu0
        %v322 = vadd.f32 %v302, %v321
        %323 = vmatmul.f32.gmra.mxu0 %v281
        %v324 = vpop.f32.mrf.mxu0
        %v325 = vadd.f32 %v302, %v324
        %326 = vmatmul.f32.gmra.mxu0 %v282
        %v327 = vpop.f32.mrf.mxu0
        %v328 = vadd.f32 %v302, %v327
        %329 = vmatmul.f32.gmra.mxu0 %v283
        %v330 = vpop.f32.mrf.mxu0
        %v331 = vadd.f32 %v302, %v330
        %332 = vdwg.mxu0
        %vm333 = vcmp.gt.f32.partialorder %v322, 0.0
        %vm334 = vcmp.gt.f32.partialorder %v325, 0.0
        %vm335 = vcmp.gt.f32.partialorder %v328, 0.0
        %vm336 = vcmp.gt.f32.partialorder %v331, 0.0
        %v337 = vmul.f32 %v322, 0.01
        %v338 = vmul.f32 %v325, 0.01
        %v339 = vmul.f32 %v328, 0.01
        %v340 = vmul.f32 %v331, 0.01
        %v341 = vsel %vm333, %v322, %v337
        %v342 = vsel %vm334, %v325, %v338
        %v343 = vsel %vm335, %v328, %v339
        %v344 = vsel %vm336, %v331, %v340
        %v345 = vld [vmem:[#allocation7] sm:$0xff]
        %v346 = vld [vmem:[#allocation7 + $0x8] sm:$0xff]
        %v347 = vld [vmem:[#allocation7 + $0x10] sm:$0xff]
        %v348 = vld [vmem:[#allocation7 + $0x18] sm:$0xff]
        %v349 = vld [vmem:[#allocation7 + $0x20] sm:$0xff]
        %v350 = vld [vmem:[#allocation7 + $0x28] sm:$0xff]
        %v351 = vld [vmem:[#allocation7 + $0x30] sm:$0xff]
        %v352 = vld [vmem:[#allocation7 + $0x38] sm:$0xff]
        %v353 = vld [vmem:[#allocation7 + $0x40] sm:$0xff]
        %v354 = vld [vmem:[#allocation7 + $0x48] sm:$0xff]
        %v355 = vld [vmem:[#allocation7 + $0x50] sm:$0xff]
        %v356 = vld [vmem:[#allocation7 + $0x58] sm:$0xff]
        %v357 = vld [vmem:[#allocation7 + $0x60] sm:$0xff]
        %v358 = vld [vmem:[#allocation7 + $0x68] sm:$0xff]
        %v359 = vld [vmem:[#allocation7 + $0x70] sm:$0xff]
        %v360 = vld [vmem:[#allocation7 + $0x78] sm:$0xff]
        %v361 = vld [vmem:[%s4] sm:$0x1]
        %v363 = vperm.slane %v361, 0
        %365 = vmatpush.msra.mxu0 %v360
        %366 = vmatpush.msra.mxu0 %v359
        %367 = vmatpush.msra.mxu0 %v358
        %368 = vmatpush.msra.mxu0 %v357
        %369 = vmatpush.msra.mxu0 %v356
        %370 = vmatpush.msra.mxu0 %v355
        %371 = vmatpush.msra.mxu0 %v354
        %372 = vmatpush.msra.mxu0 %v353
        %373 = vmatpush.msra.mxu0 %v352
        %374 = vmatpush.msra.mxu0 %v351
        %375 = vmatpush.msra.mxu0 %v350
        %376 = vmatpush.msra.mxu0 %v349
        %377 = vmatpush.msra.mxu0 %v348
        %378 = vmatpush.msra.mxu0 %v347
        %379 = vmatpush.msra.mxu0 %v346
        %380 = vmatpush.msra.mxu0 %v345
        %381 = vmatmul.f32.gmra.mxu0 %v341
        %v382 = vpop.f32.mrf.mxu0
        %v383 = vadd.f32 %v363, %v382
        %384 = vmatmul.f32.gmra.mxu0 %v342
        %v385 = vpop.f32.mrf.mxu0
        %v386 = vadd.f32 %v363, %v385
        %387 = vmatmul.f32.gmra.mxu0 %v343
        %v388 = vpop.f32.mrf.mxu0
        %v389 = vadd.f32 %v363, %v388
        %390 = vmatmul.f32.gmra.mxu0 %v344
        %v391 = vpop.f32.mrf.mxu0
        %v392 = vadd.f32 %v363, %v391
        %393 = vdwg.mxu0
        %vm394 = vcmp.gt.f32.partialorder %v383, 0.0
        %vm395 = vcmp.gt.f32.partialorder %v386, 0.0
        %vm396 = vcmp.gt.f32.partialorder %v389, 0.0
        %vm397 = vcmp.gt.f32.partialorder %v392, 0.0
        %v398 = vmul.f32 %v383, 0.01
        %v399 = vmul.f32 %v386, 0.01
        %v400 = vmul.f32 %v389, 0.01
        %v401 = vmul.f32 %v392, 0.01
        %v402 = vsel %vm394, %v383, %v398
        %v403 = vsel %vm395, %v386, %v399
        %v404 = vsel %vm396, %v389, %v400
        %v405 = vsel %vm397, %v392, %v401
        %406 = vst [vmem:[%s277] sm:$0xff] %v402
        %407 = vst [vmem:[%s277 + $0x8] sm:$0xff] %v403
        %408 = vst [vmem:[%s277 + $0x10] sm:$0xff] %v404
        %409 = vst [vmem:[%s277 + $0x18] sm:$0xff] %v405
        %s410 = sand.u32 %s141, 1
        %s411 = scalar_lea.sflag [#allocation4], %s410
        %s412 = sand.u32 %s141, 1
        %s413 = smul.addr %s412, 32
        %s414 = scalar_lea.vmem [#allocation8], %s413
        // Predicated region
        $region53: #{tpu_custom_call.1} parent=39 // pred_check
          %p415 = pneg %p151
        $region54: #{tpu_custom_call.1} parent=39 // pred_check_branch
          %417 = sbr.rel (%p415) target = $region56
        $region55: #{tpu_custom_call.1} parent=39 // pred_region
          %s418 = smul.u32 4, %s23
          %420 = vsyncadd %s411, 0
          %s421 = smul.addr %s418, 8
          %s422 = scalar_lea.hbm %s5, %s421
          %s423 = sshll.u32 %s414, 4
          %s424 = int_to_ptr.vmem [resolvable:$true] %s423
          %s425 = sshll.u32 %s422, 4
          %s426 = int_to_ptr.hbm [resolvable:$true] %s425
          %431 = dma.vmem_to_hbm [thread:$0]  %s424, 512, %s426, %s411, 128, 128, 8
        $region56: #{tpu_custom_call.1} parent=39 // pred_fallthru
          _
      $region40: #{tpu_custom_call.1} parent=5 // pred_fallthru
        _
      %p432 = scmp.le.s32.totalorder 2, %s18
      // Predicated region
      $region57: #{tpu_custom_call.1} parent=5 // pred_check
        %p433 = pneg %p432
      $region58: #{tpu_custom_call.1} parent=5 // pred_check_branch
        %435 = sbr.rel (%p433) target = $region60
      $region59: #{tpu_custom_call.1} parent=5 // pred_region
        %s436 = ssub.s32 %s18, 2
        // Predicated region
        $region61: #{tpu_custom_call.1} parent=59 // pred_check
          %p437 = pneg %p157
        $region62: #{tpu_custom_call.1} parent=59 // pred_check_branch
          %439 = sbr.rel (%p437) target = $region64
        $region63: #{tpu_custom_call.1} parent=59 // pred_region
          %s440 = sand.u32 %s142, 1
          %s441 = scalar_lea.sflag [#allocation4], %s440
          %s442 = sand.u32 %s142, 1
          %s443 = smul.addr %s442, 32
          %s444 = scalar_lea.vmem [#allocation8], %s443
          %446 = dma.done %s441, 512
        $region64: #{tpu_custom_call.1} parent=59 // pred_fallthru
          _
      $region60: #{tpu_custom_call.1} parent=5 // pred_fallthru
        _
    $region6: #{tpu_custom_call.1} parent=1 // loop_footer
      %s22 = sadd.s32 1, %s18
    $region7: #{tpu_custom_call.1} parent=1 // loop_footer_branch
      %17 = sbr.rel target = $region3
    $region8: #{tpu_custom_call.1} parent=1 // loop_exit
      _
    %447 = vsyncpa [#allocation3], 1
    %s448 = scalar_lea.sflag [#allocation3], 1
    %449 = vsyncpa %s448, 1
    %450 = vsyncpa [#allocation6], 1
    %451 = vsyncpa [#allocation4], 1
    %s452 = scalar_lea.sflag [#allocation4], 1
    %453 = vsyncpa %s452, 1

</llo_original>
